<compile_context>
chip_gen: v7x
topology: tpu7x:2x2x1
jax: 0.10.0
libtpu: 0.0.40
codegen_flags: <defaults>
</compile_context>

<pallas_src>
import jax
import jax.numpy as jnp
from jax.experimental import pallas as pl
from jax.experimental.pallas import tpu as pltpu

BOARD_SIZE = 8                           # small synthetic board
IN_DIM = BOARD_SIZE * BOARD_SIZE * 4     # 256
HIDDEN = 256
OUT_DIM = 4
OUT_PAD = 128                            # lane-dense padded output width
TILE_B_MAX = 512                         # batch tile (rows) upper bound


def _round_up(x, m):
    return ((x + m - 1) // m) * m


def _mlp_kernel(x_ref, w1_ref, b1_ref, w2_ref, b2_ref, w3_ref, b3_ref, o_ref):
    # x, w1, w2, w3 are bf16; biases / activations f32; MXU accumulates in f32.
    x = x_ref[...]                                                   # (TB, IN_DIM) bf16

    # Layer 1: Linear(IN_DIM, 256) + ReLU
    h1 = jnp.dot(x, w1_ref[...], preferred_element_type=jnp.float32)
    h1 = jnp.maximum(h1 + b1_ref[...], 0.0)                          # f32

    # Layer 2: Linear(256, 256) + ReLU
    h2 = jnp.dot(h1.astype(jnp.bfloat16), w2_ref[...],
                 preferred_element_type=jnp.float32)
    h2 = jnp.maximum(h2 + b2_ref[...], 0.0)                          # f32

    # Layer 3: Linear(256, 128-padded) + Sigmoid
    h3 = jnp.dot(h2.astype(jnp.bfloat16), w3_ref[...],
                 preferred_element_type=jnp.float32)
    h3 = h3 + b3_ref[...]
    # sigmoid(x) = 0.5 * (tanh(x/2) + 1)  -- stable, EUP transcendental.
    o_ref[...] = (0.5 * (jnp.tanh(0.5 * h3) + 1.0)).astype(o_ref.dtype)


@jax.jit
def neural_network_forward(boards, turns, params):
    """Forward pass of NeuralNetwork. `turns` is ignored (as in PyTorch)."""
    del turns
    b = boards.shape[0]
    x = boards.reshape(b, -1)                         # nn.Flatten() on NCHW

    w1, b1, w2, b2, w3, b3 = params

    # bf16 matmul operands; biases stay f32.
    x_bf = x.astype(jnp.bfloat16)
    w1_bf = w1.astype(jnp.bfloat16)
    w2_bf = w2.astype(jnp.bfloat16)
    w3_bf = w3.astype(jnp.bfloat16)

    # Pad the 4-wide last layer to a lane-dense 128-wide output.
    w3_p = jnp.pad(w3_bf, ((0, 0), (0, OUT_PAD - OUT_DIM)))
    b3_p = jnp.pad(b3, ((0, 0), (0, OUT_PAD - OUT_DIM)))

    # Batch tiling: tile_b multiple of 8, batch zero-padded to a multiple of it.
    tile_b = min(TILE_B_MAX, _round_up(b, 8))
    b_pad = _round_up(b, tile_b)
    if b_pad != b:
        x_bf = jnp.pad(x_bf, ((0, b_pad - b), (0, 0)))

    grid = (b_pad // tile_b,)

    out = pl.pallas_call(
        _mlp_kernel,
        out_shape=jax.ShapeDtypeStruct((b_pad, OUT_PAD), jnp.float32),
        grid=grid,
        in_specs=[
            pl.BlockSpec((tile_b, IN_DIM), lambda i: (i, 0)),   # x: tiled over batch
            pl.BlockSpec((IN_DIM, HIDDEN), lambda i: (0, 0)),   # weights: resident
            pl.BlockSpec((1, HIDDEN), lambda i: (0, 0)),
            pl.BlockSpec((HIDDEN, HIDDEN), lambda i: (0, 0)),
            pl.BlockSpec((1, HIDDEN), lambda i: (0, 0)),
            pl.BlockSpec((HIDDEN, OUT_PAD), lambda i: (0, 0)),
            pl.BlockSpec((1, OUT_PAD), lambda i: (0, 0)),
        ],
        out_specs=pl.BlockSpec((tile_b, OUT_PAD), lambda i: (i, 0)),
        compiler_params=pltpu.CompilerParams(
            dimension_semantics=("parallel",)),                 # v7x: 2 TCs
    )(x_bf, w1_bf, b1, w2_bf, b2, w3_p, b3_p)

    return out[:b, :OUT_DIM]


def init_params(key):
    """Deterministic init mimicking torch.nn.Linear defaults:
    U(-1/sqrt(fan_in), 1/sqrt(fan_in)) for both weight and bias.
    Weights stored as (in, out) so the kernel computes x @ W."""
    k1, k2, k3, k4, k5, k6 = jax.random.split(key, 6)

    def lin(kw, kb, fan_in, fan_out):
        bound = 1.0 / float(fan_in) ** 0.5
        w = jax.random.uniform(kw, (fan_in, fan_out), jnp.float32, -bound, bound)
        b = jax.random.uniform(kb, (1, fan_out), jnp.float32, -bound, bound)
        return w, b

    w1, b1 = lin(k1, k2, IN_DIM, HIDDEN)
    w2, b2 = lin(k3, k4, HIDDEN, HIDDEN)
    w3, b3 = lin(k5, k6, HIDDEN, OUT_DIM)
    return (w1, b1, w2, b2, w3, b3)


if __name__ == "__main__":
    key = jax.random.PRNGKey(0)
    kp, kb, kt = jax.random.split(key, 3)

    params = init_params(kp)

    batch = 8
    boards = jax.random.normal(kb, (batch, 4, BOARD_SIZE, BOARD_SIZE), jnp.float32)
    turns = jax.random.randint(kt, (batch,), 0, 2)  # unused by forward (PyTorch parity)

    out = neural_network_forward(boards, turns, params)
    out = jax.block_until_ready(out)

    # Sanity: shape (batch, 4), sigmoid range, finite values.
    assert out.shape == (batch, OUT_DIM)
    assert bool(jnp.all(jnp.isfinite(out)))
    assert bool(jnp.all((out >= 0.0) & (out <= 1.0)))

    # Cross-check against a pure-JAX f32 reference (bf16 matmuls drift slightly).
    w1, b1, w2, b2, w3, b3 = params
    xref = boards.reshape(batch, -1)
    ref = jax.nn.sigmoid(
        jnp.maximum(jnp.maximum(xref @ w1 + b1, 0.0) @ w2 + b2, 0.0) @ w3 + b3)
    assert bool(jnp.all(jnp.abs(out - ref) < 5e-2))

    print("KERNEL_OK")
</pallas_src>

<mosaic_0001>
module attributes {stable_mosaic.version = 11 : i64} {
  func.func @_mlp_kernel(%arg0: i32, %arg1: memref<8x256xbf16, #tpu.memory_space<vmem>>, %arg2: memref<256x256xbf16, #tpu.memory_space<vmem>>, %arg3: memref<1x256xf32, #tpu.memory_space<vmem>>, %arg4: memref<256x256xbf16, #tpu.memory_space<vmem>>, %arg5: memref<1x256xf32, #tpu.memory_space<vmem>>, %arg6: memref<256x128xbf16, #tpu.memory_space<vmem>>, %arg7: memref<1x128xf32, #tpu.memory_space<vmem>>, %arg8: memref<8x128xf32, #tpu.memory_space<vmem>>) attributes {dimension_semantics = [#tpu.dimension_semantics<parallel>], iteration_bounds = array<i64: 1>, scalar_prefetch = 0 : i64, scratch_operands = 0 : i64, tpu.core_type = #tpu.core_type<tc>, window_params = [{transform_indices = @transform_0, window_bounds = array<i64: 8, 256>}, {pipeline_mode = #tpu.pipeline_mode<synchronous>, transform_indices = @transform_1, window_bounds = array<i64: 256, 256>}, {pipeline_mode = #tpu.pipeline_mode<synchronous>, transform_indices = @transform_2, window_bounds = array<i64: 1, 256>}, {pipeline_mode = #tpu.pipeline_mode<synchronous>, transform_indices = @transform_3, window_bounds = array<i64: 256, 256>}, {pipeline_mode = #tpu.pipeline_mode<synchronous>, transform_indices = @transform_4, window_bounds = array<i64: 1, 256>}, {pipeline_mode = #tpu.pipeline_mode<synchronous>, transform_indices = @transform_5, window_bounds = array<i64: 256, 128>}, {pipeline_mode = #tpu.pipeline_mode<synchronous>, transform_indices = @transform_6, window_bounds = array<i64: 1, 128>}, {transform_indices = @transform_7, window_bounds = array<i64: 8, 128>}]} {
    %c0 = arith.constant 0 : index
    %c0_0 = arith.constant 0 : index
    %0 = vector.load %arg1[%c0, %c0_0] : memref<8x256xbf16, #tpu.memory_space<vmem>>, vector<8x256xbf16>
    %c0_1 = arith.constant 0 : index
    %c0_2 = arith.constant 0 : index
    %1 = vector.load %arg2[%c0_1, %c0_2] : memref<256x256xbf16, #tpu.memory_space<vmem>>, vector<256x256xbf16>
    %cst = arith.constant dense<0.000000e+00> : vector<8x256xf32>
    %2 = tpu.matmul %0, %1, %cst {dimension_numbers = #tpu.dot_dimension_numbers<[1], [0], [0], [1], [0, 0, 1, 1], [], []>} : vector<8x256xbf16>, vector<256x256xbf16>, vector<8x256xf32> -> vector<8x256xf32>
    %c0_3 = arith.constant 0 : index
    %c0_4 = arith.constant 0 : index
    %3 = vector.load %arg3[%c0_3, %c0_4] : memref<1x256xf32, #tpu.memory_space<vmem>>, vector<1x256xf32>
    %4 = vector.broadcast %3 : vector<1x256xf32> to vector<8x256xf32>
    %5 = arith.addf %2, %4 : vector<8x256xf32>
    %cst_5 = arith.constant 0.000000e+00 : f32
    %6 = vector.broadcast %cst_5 : f32 to vector<8x256xf32>
    %7 = arith.maximumf %5, %6 : vector<8x256xf32>
    %8 = arith.truncf %7 : vector<8x256xf32> to vector<8x256xbf16>
    %c0_6 = arith.constant 0 : index
    %c0_7 = arith.constant 0 : index
    %9 = vector.load %arg4[%c0_6, %c0_7] : memref<256x256xbf16, #tpu.memory_space<vmem>>, vector<256x256xbf16>
    %cst_8 = arith.constant dense<0.000000e+00> : vector<8x256xf32>
    %10 = tpu.matmul %8, %9, %cst_8 {dimension_numbers = #tpu.dot_dimension_numbers<[1], [0], [0], [1], [0, 0, 1, 1], [], []>} : vector<8x256xbf16>, vector<256x256xbf16>, vector<8x256xf32> -> vector<8x256xf32>
    %c0_9 = arith.constant 0 : index
    %c0_10 = arith.constant 0 : index
    %11 = vector.load %arg5[%c0_9, %c0_10] : memref<1x256xf32, #tpu.memory_space<vmem>>, vector<1x256xf32>
    %12 = vector.broadcast %11 : vector<1x256xf32> to vector<8x256xf32>
    %13 = arith.addf %10, %12 : vector<8x256xf32>
    %cst_11 = arith.constant 0.000000e+00 : f32
    %14 = vector.broadcast %cst_11 : f32 to vector<8x256xf32>
    %15 = arith.maximumf %13, %14 : vector<8x256xf32>
    %16 = arith.truncf %15 : vector<8x256xf32> to vector<8x256xbf16>
    %c0_12 = arith.constant 0 : index
    %c0_13 = arith.constant 0 : index
    %17 = vector.load %arg6[%c0_12, %c0_13] : memref<256x128xbf16, #tpu.memory_space<vmem>>, vector<256x128xbf16>
    %cst_14 = arith.constant dense<0.000000e+00> : vector<8x128xf32>
    %18 = tpu.matmul %16, %17, %cst_14 {dimension_numbers = #tpu.dot_dimension_numbers<[1], [0], [0], [1], [0, 0, 1, 1], [], []>} : vector<8x256xbf16>, vector<256x128xbf16>, vector<8x128xf32> -> vector<8x128xf32>
    %c0_15 = arith.constant 0 : index
    %c0_16 = arith.constant 0 : index
    %19 = vector.load %arg7[%c0_15, %c0_16] : memref<1x128xf32, #tpu.memory_space<vmem>>, vector<1x128xf32>
    %20 = vector.broadcast %19 : vector<1x128xf32> to vector<8x128xf32>
    %21 = arith.addf %18, %20 : vector<8x128xf32>
    %cst_17 = arith.constant 5.000000e-01 : f32
    %22 = vector.broadcast %cst_17 : f32 to vector<8x128xf32>
    %23 = arith.mulf %22, %21 : vector<8x128xf32>
    %24 = math.tanh %23 : vector<8x128xf32>
    %cst_18 = arith.constant 1.000000e+00 : f32
    %25 = vector.broadcast %cst_18 : f32 to vector<8x128xf32>
    %26 = arith.addf %24, %25 : vector<8x128xf32>
    %cst_19 = arith.constant 5.000000e-01 : f32
    %27 = vector.broadcast %cst_19 : f32 to vector<8x128xf32>
    %28 = arith.mulf %27, %26 : vector<8x128xf32>
    %c0_20 = arith.constant 0 : index
    %c0_21 = arith.constant 0 : index
    %29 = vector.load %arg8[%c0_20, %c0_21] : memref<8x128xf32, #tpu.memory_space<vmem>>, vector<8x128xf32>
    tpu.vector_store %arg8[%c0_20, %c0_21], %28 {strides = array<i32>} : memref<8x128xf32, #tpu.memory_space<vmem>>, vector<8x128xf32>,
    return
  }
  func.func @transform_0(%arg0: i32) -> (i32, i32) {
    %c0_i32 = arith.constant 0 : i32
    %c0_i32_0 = arith.constant 0 : i32
    return %arg0, %c0_i32 : i32, i32
  }
  func.func @transform_1(%arg0: i32) -> (i32, i32) {
    %c0_i32 = arith.constant 0 : i32
    %c0_i32_0 = arith.constant 0 : i32
    %c0_i32_1 = arith.constant 0 : i32
    return %c0_i32, %c0_i32_0 : i32, i32
  }
  func.func @transform_2(%arg0: i32) -> (i32, i32) {
    %c0_i32 = arith.constant 0 : i32
    %c0_i32_0 = arith.constant 0 : i32
    %c0_i32_1 = arith.constant 0 : i32
    return %c0_i32, %c0_i32_0 : i32, i32
  }
  func.func @transform_3(%arg0: i32) -> (i32, i32) {
    %c0_i32 = arith.constant 0 : i32
    %c0_i32_0 = arith.constant 0 : i32
    %c0_i32_1 = arith.constant 0 : i32
    return %c0_i32, %c0_i32_0 : i32, i32
  }
  func.func @transform_4(%arg0: i32) -> (i32, i32) {
    %c0_i32 = arith.constant 0 : i32
    %c0_i32_0 = arith.constant 0 : i32
    %c0_i32_1 = arith.constant 0 : i32
    return %c0_i32, %c0_i32_0 : i32, i32
  }
  func.func @transform_5(%arg0: i32) -> (i32, i32) {
    %c0_i32 = arith.constant 0 : i32
    %c0_i32_0 = arith.constant 0 : i32
    %c0_i32_1 = arith.constant 0 : i32
    return %c0_i32, %c0_i32_0 : i32, i32
  }
  func.func @transform_6(%arg0: i32) -> (i32, i32) {
    %c0_i32 = arith.constant 0 : i32
    %c0_i32_0 = arith.constant 0 : i32
    %c0_i32_1 = arith.constant 0 : i32
    return %c0_i32, %c0_i32_0 : i32, i32
  }
  func.func @transform_7(%arg0: i32) -> (i32, i32) {
    %c0_i32 = arith.constant 0 : i32
    %c0_i32_0 = arith.constant 0 : i32
    return %arg0, %c0_i32 : i32, i32
  }
}

</mosaic_0001>

<llo_original>
// kernel: neural_network_forward.1
$region0: #{neural_network_forward.1}
  #allocation0 [shape = 'u32[]', space=smem, size = 0x4, offset = 0x4, fixed_abs, tag = 'smem constant byte address 0x4 - core index']
  #allocation1 [shape = 'u32[144,128]{1,0:T(1,128)}', space=vmem, size = 0x12000, scoped, tag = 'internal scratch']
  %s0 = inlined_call_operand.vmem [shape: bf16[8,256], index: 0, kind: input, shape index: {}]
  %s1 = inlined_call_operand.vmem [shape: bf16[256,256], index: 1, kind: input, shape index: {}]
  %s2 = inlined_call_operand.vmem [shape: f32[1,256], index: 2, kind: input, shape index: {}]
  %s3 = inlined_call_operand.vmem [shape: bf16[256,256], index: 3, kind: input, shape index: {}]
  %s4 = inlined_call_operand.vmem [shape: f32[1,256], index: 4, kind: input, shape index: {}]
  %s5 = inlined_call_operand.vmem [shape: bf16[256,128], index: 5, kind: input, shape index: {}]
  %s6 = inlined_call_operand.vmem [shape: f32[1,128], index: 6, kind: input, shape index: {}]
  %s7 = inlined_call_operand.vmem [shape: f32[8,128], index: 7, kind: output, shape index: {}]
  %s8 = sld [smem:[#allocation0]]
  $region38: #{neural_network_forward.1} parent=0
    _
  %s10 = ssub.s32 1, %s8
  %s11 = scalar_select 0, %s10, %s8
  // Predicated region
  $region2: #{neural_network_forward.1} parent=0 // pred_check
    _
  $region3: #{neural_network_forward.1} parent=0 // pred_check_branch
    %13 = sbr.rel (0) target = $region5
  $region4: #{neural_network_forward.1} parent=0 // pred_region
    _
  $region5: #{neural_network_forward.1} parent=0 // pred_fallthru
    _
  // Predicated region
  $region6: #{neural_network_forward.1} parent=0 // pred_check
    _
  $region7: #{neural_network_forward.1} parent=0 // pred_check_branch
    %15 = sbr.rel (0) target = $region9
  $region8: #{neural_network_forward.1} parent=0 // pred_region
    _
  $region9: #{neural_network_forward.1} parent=0 // pred_fallthru
    _
  // Predicated region
  $region10: #{neural_network_forward.1} parent=0 // pred_check
    _
  $region11: #{neural_network_forward.1} parent=0 // pred_check_branch
    %17 = sbr.rel (0) target = $region13
  $region12: #{neural_network_forward.1} parent=0 // pred_region
    _
  $region13: #{neural_network_forward.1} parent=0 // pred_fallthru
    _
  // Predicated region
  $region14: #{neural_network_forward.1} parent=0 // pred_check
    _
  $region15: #{neural_network_forward.1} parent=0 // pred_check_branch
    %19 = sbr.rel (0) target = $region17
  $region16: #{neural_network_forward.1} parent=0 // pred_region
    _
  $region17: #{neural_network_forward.1} parent=0 // pred_fallthru
    _
  // Predicated region
  $region18: #{neural_network_forward.1} parent=0 // pred_check
    _
  $region19: #{neural_network_forward.1} parent=0 // pred_check_branch
    %21 = sbr.rel (0) target = $region21
  $region20: #{neural_network_forward.1} parent=0 // pred_region
    _
  $region21: #{neural_network_forward.1} parent=0 // pred_fallthru
    _
  // Predicated region
  $region22: #{neural_network_forward.1} parent=0 // pred_check
    _
  $region23: #{neural_network_forward.1} parent=0 // pred_check_branch
    %23 = sbr.rel (0) target = $region25
  $region24: #{neural_network_forward.1} parent=0 // pred_region
    _
  $region25: #{neural_network_forward.1} parent=0 // pred_fallthru
    _
  // Predicated region
  $region26: #{neural_network_forward.1} parent=0 // pred_check
    _
  $region27: #{neural_network_forward.1} parent=0 // pred_check_branch
    %25 = sbr.rel (0) target = $region29
  $region28: #{neural_network_forward.1} parent=0 // pred_region
    _
  $region29: #{neural_network_forward.1} parent=0 // pred_fallthru
    _
  %v27 = vld [vmem:[%s0] sm:$0xff]
  %v28 = vld [vmem:[%s1] sm:$0xff]
  %v29 = vld [vmem:[%s1 + $0x8] sm:$0xff]
  %v30 = vld [vmem:[%s1 + $0x10] sm:$0xff]
  %v31 = vld [vmem:[%s1 + $0x18] sm:$0xff]
  %v32 = vld [vmem:[%s1 + $0x20] sm:$0xff]
  %v33 = vld [vmem:[%s1 + $0x28] sm:$0xff]
  %v34 = vld [vmem:[%s1 + $0x30] sm:$0xff]
  %v35 = vld [vmem:[%s1 + $0x38] sm:$0xff]
  %v36 = vld [vmem:[%s1 + $0x40] sm:$0xff]
  %v37 = vld [vmem:[%s1 + $0x48] sm:$0xff]
  %v38 = vld [vmem:[%s1 + $0x50] sm:$0xff]
  %v39 = vld [vmem:[%s1 + $0x58] sm:$0xff]
  %v40 = vld [vmem:[%s1 + $0x60] sm:$0xff]
  %v41 = vld [vmem:[%s1 + $0x68] sm:$0xff]
  %v42 = vld [vmem:[%s1 + $0x70] sm:$0xff]
  %v43 = vld [vmem:[%s1 + $0x78] sm:$0xff]
  %v44 = vld [vmem:[%s1 + $0x80] sm:$0xff]
  %v45 = vld [vmem:[%s1 + $0x88] sm:$0xff]
  %v46 = vld [vmem:[%s1 + $0x90] sm:$0xff]
  %v47 = vld [vmem:[%s1 + $0x98] sm:$0xff]
  %v48 = vld [vmem:[%s1 + $0xa0] sm:$0xff]
  %v49 = vld [vmem:[%s1 + $0xa8] sm:$0xff]
  %v50 = vld [vmem:[%s1 + $0xb0] sm:$0xff]
  %v51 = vld [vmem:[%s1 + $0xb8] sm:$0xff]
  %v52 = vld [vmem:[%s1 + $0xc0] sm:$0xff]
  %v53 = vld [vmem:[%s1 + $0xc8] sm:$0xff]
  %v54 = vld [vmem:[%s1 + $0xd0] sm:$0xff]
  %v55 = vld [vmem:[%s1 + $0xd8] sm:$0xff]
  %v56 = vld [vmem:[%s1 + $0xe0] sm:$0xff]
  %v57 = vld [vmem:[%s1 + $0xe8] sm:$0xff]
  %v58 = vld [vmem:[%s1 + $0xf0] sm:$0xff]
  %v59 = vld [vmem:[%s1 + $0xf8] sm:$0xff]
  %v60 = vld [vmem:[%s2] sm:$0x3]
  %v62 = vlaneseq
  %v63 = vshrl.u32 %v62, 7
  %v64 = vsub.s32 0, %v63
  %v65 = vrot.slane %v60, %v64
  %v66 = vlaneseq
  %v67 = vshrl.u32 %v66, 7
  %v68 = vsub.s32 1, %v67
  %v69 = vrot.slane %v60, %v68
  %v73 = vunpack.c.l.b16 %v27
  %v74 = vunpack.c.h.b16 %v27
  %v75 = vpack.c.b16 %v73, %v73
  %v76 = vpack.c.b16 %v74, %v74
  %v111 = vunpack.c.l.b16 %v28
  %v112 = vunpack.c.h.b16 %v28
  %v113 = vunpack.c.l.b16 %v29
  %v114 = vunpack.c.h.b16 %v29
  %v115 = vunpack.c.l.b16 %v30
  %v116 = vunpack.c.h.b16 %v30
  %v117 = vunpack.c.l.b16 %v31
  %v118 = vunpack.c.h.b16 %v31
  %v119 = vunpack.c.l.b16 %v32
  %v120 = vunpack.c.h.b16 %v32
  %v121 = vunpack.c.l.b16 %v33
  %v122 = vunpack.c.h.b16 %v33
  %v123 = vunpack.c.l.b16 %v34
  %v124 = vunpack.c.h.b16 %v34
  %v125 = vunpack.c.l.b16 %v35
  %v126 = vunpack.c.h.b16 %v35
  %v127 = vunpack.c.l.b16 %v36
  %v128 = vunpack.c.h.b16 %v36
  %v129 = vunpack.c.l.b16 %v37
  %v130 = vunpack.c.h.b16 %v37
  %v131 = vunpack.c.l.b16 %v38
  %v132 = vunpack.c.h.b16 %v38
  %v133 = vunpack.c.l.b16 %v39
  %v134 = vunpack.c.h.b16 %v39
  %v135 = vunpack.c.l.b16 %v40
  %v136 = vunpack.c.h.b16 %v40
  %v137 = vunpack.c.l.b16 %v41
  %v138 = vunpack.c.h.b16 %v41
  %v139 = vunpack.c.l.b16 %v42
  %v140 = vunpack.c.h.b16 %v42
  %v141 = vunpack.c.l.b16 %v43
  %v142 = vunpack.c.h.b16 %v43
  %v143 = vunpack.c.l.b16 %v44
  %v144 = vunpack.c.h.b16 %v44
  %v145 = vunpack.c.l.b16 %v45
  %v146 = vunpack.c.h.b16 %v45
  %v147 = vunpack.c.l.b16 %v46
  %v148 = vunpack.c.h.b16 %v46
  %v149 = vunpack.c.l.b16 %v47
  %v150 = vunpack.c.h.b16 %v47
  %v151 = vunpack.c.l.b16 %v48
  %v152 = vunpack.c.h.b16 %v48
  %v153 = vunpack.c.l.b16 %v49
  %v154 = vunpack.c.h.b16 %v49
  %v155 = vunpack.c.l.b16 %v50
  %v156 = vunpack.c.h.b16 %v50
  %v157 = vunpack.c.l.b16 %v51
  %v158 = vunpack.c.h.b16 %v51
  %v159 = vunpack.c.l.b16 %v52
  %v160 = vunpack.c.h.b16 %v52
  %v161 = vunpack.c.l.b16 %v53
  %v162 = vunpack.c.h.b16 %v53
  %v163 = vunpack.c.l.b16 %v54
  %v164 = vunpack.c.h.b16 %v54
  %v165 = vunpack.c.l.b16 %v55
  %v166 = vunpack.c.h.b16 %v55
  %v167 = vunpack.c.l.b16 %v56
  %v168 = vunpack.c.h.b16 %v56
  %v169 = vunpack.c.l.b16 %v57
  %v170 = vunpack.c.h.b16 %v57
  %v171 = vunpack.c.l.b16 %v58
  %v172 = vunpack.c.h.b16 %v58
  %v173 = vunpack.c.l.b16 %v59
  %v174 = vunpack.c.h.b16 %v59
  %v175 = vpack.c.b16 %v113, %v111
  %v176 = vpack.c.b16 %v114, %v112
  %v177 = vpack.c.b16 %v117, %v115
  %v178 = vpack.c.b16 %v118, %v116
  %v179 = vpack.c.b16 %v121, %v119
  %v180 = vpack.c.b16 %v122, %v120
  %v181 = vpack.c.b16 %v125, %v123
  %v182 = vpack.c.b16 %v126, %v124
  %v183 = vpack.c.b16 %v129, %v127
  %v184 = vpack.c.b16 %v130, %v128
  %v185 = vpack.c.b16 %v133, %v131
  %v186 = vpack.c.b16 %v134, %v132
  %v187 = vpack.c.b16 %v137, %v135
  %v188 = vpack.c.b16 %v138, %v136
  %v189 = vpack.c.b16 %v141, %v139
  %v190 = vpack.c.b16 %v142, %v140
  %v191 = vpack.c.b16 %v145, %v143
  %v192 = vpack.c.b16 %v146, %v144
  %v193 = vpack.c.b16 %v149, %v147
  %v194 = vpack.c.b16 %v150, %v148
  %v195 = vpack.c.b16 %v153, %v151
  %v196 = vpack.c.b16 %v154, %v152
  %v197 = vpack.c.b16 %v157, %v155
  %v198 = vpack.c.b16 %v158, %v156
  %v199 = vpack.c.b16 %v161, %v159
  %v200 = vpack.c.b16 %v162, %v160
  %v201 = vpack.c.b16 %v165, %v163
  %v202 = vpack.c.b16 %v166, %v164
  %v203 = vpack.c.b16 %v169, %v167
  %v204 = vpack.c.b16 %v170, %v168
  %v205 = vpack.c.b16 %v173, %v171
  %v206 = vpack.c.b16 %v174, %v172
  %239 = vmatprep.subr.bf16.mxu0 %v176
  %240 = vmatpush1.bf16.msra.mxu0 %v175
  %241 = vmatprep.subr.bf16.mxu0 %v178
  %242 = vmatpush1.bf16.msra.mxu0 %v177
  %243 = vmatprep.subr.bf16.mxu0 %v180
  %244 = vmatpush1.bf16.msra.mxu0 %v179
  %245 = vmatprep.subr.bf16.mxu0 %v182
  %246 = vmatpush1.bf16.msra.mxu0 %v181
  %247 = vmatprep.subr.bf16.mxu0 %v184
  %248 = vmatpush1.bf16.msra.mxu0 %v183
  %249 = vmatprep.subr.bf16.mxu0 %v186
  %250 = vmatpush1.bf16.msra.mxu0 %v185
  %251 = vmatprep.subr.bf16.mxu0 %v188
  %252 = vmatpush1.bf16.msra.mxu0 %v187
  %253 = vmatprep.subr.bf16.mxu0 %v190
  %254 = vmatpush1.bf16.msra.mxu0 %v189
  %255 = vmatprep.subr.bf16.mxu0 %v192
  %256 = vmatpush1.bf16.msra.mxu0 %v191
  %257 = vmatprep.subr.bf16.mxu0 %v194
  %258 = vmatpush1.bf16.msra.mxu0 %v193
  %259 = vmatprep.subr.bf16.mxu0 %v196
  %260 = vmatpush1.bf16.msra.mxu0 %v195
  %261 = vmatprep.subr.bf16.mxu0 %v198
  %262 = vmatpush1.bf16.msra.mxu0 %v197
  %263 = vmatprep.subr.bf16.mxu0 %v200
  %264 = vmatpush1.bf16.msra.mxu0 %v199
  %265 = vmatprep.subr.bf16.mxu0 %v202
  %266 = vmatpush1.bf16.msra.mxu0 %v201
  %267 = vmatprep.subr.bf16.mxu0 %v204
  %268 = vmatpush1.bf16.msra.mxu0 %v203
  %269 = vmatprep.subr.bf16.mxu0 %v206
  %270 = vmatpush1.bf16.msra.mxu0 %v205
  %271 = vmatprep.mubr.bf16.mxu0 %v76
  %272 = vmatmul.mubr.bf16.gmra.mrb[0].mxu0 %v75
  %v273 = vpop.f32.mrb[0].mxu0
  %v274 = vadd.f32 %v65, %v273
  %v275 = vpop.f32.mrb[0].mxu0
  %v276 = vadd.f32 %v69, %v275
  %v277 = vpop.f32.mrb[0].mxu0
  %v278 = vpop.f32.mrb[0].mxu0
  %279 = vdwg.mxu0
  %v280 = vmax.f32 %v274, 0.0
  %v281 = vmax.f32 %v276, 0.0
  %v282 = vpack.c.bf16 %v280, %v280
  %v283 = vpack.c.bf16 %v281, %v281
  %v284 = vld [vmem:[%s3] sm:$0xff]
  %v285 = vld [vmem:[%s3 + $0x8] sm:$0xff]
  %v286 = vld [vmem:[%s3 + $0x10] sm:$0xff]
  %v287 = vld [vmem:[%s3 + $0x18] sm:$0xff]
  %v288 = vld [vmem:[%s3 + $0x20] sm:$0xff]
  %v289 = vld [vmem:[%s3 + $0x28] sm:$0xff]
  %v290 = vld [vmem:[%s3 + $0x30] sm:$0xff]
  %v291 = vld [vmem:[%s3 + $0x38] sm:$0xff]
  %v292 = vld [vmem:[%s3 + $0x40] sm:$0xff]
  %v293 = vld [vmem:[%s3 + $0x48] sm:$0xff]
  %v294 = vld [vmem:[%s3 + $0x50] sm:$0xff]
  %v295 = vld [vmem:[%s3 + $0x58] sm:$0xff]
  %v296 = vld [vmem:[%s3 + $0x60] sm:$0xff]
  %v297 = vld [vmem:[%s3 + $0x68] sm:$0xff]
  %v298 = vld [vmem:[%s3 + $0x70] sm:$0xff]
  %v299 = vld [vmem:[%s3 + $0x78] sm:$0xff]
  %v300 = vld [vmem:[%s3 + $0x80] sm:$0xff]
  %v301 = vld [vmem:[%s3 + $0x88] sm:$0xff]
  %v302 = vld [vmem:[%s3 + $0x90] sm:$0xff]
  %v303 = vld [vmem:[%s3 + $0x98] sm:$0xff]
  %v304 = vld [vmem:[%s3 + $0xa0] sm:$0xff]
  %v305 = vld [vmem:[%s3 + $0xa8] sm:$0xff]
  %v306 = vld [vmem:[%s3 + $0xb0] sm:$0xff]
  %v307 = vld [vmem:[%s3 + $0xb8] sm:$0xff]
  %v308 = vld [vmem:[%s3 + $0xc0] sm:$0xff]
  %v309 = vld [vmem:[%s3 + $0xc8] sm:$0xff]
  %v310 = vld [vmem:[%s3 + $0xd0] sm:$0xff]
  %v311 = vld [vmem:[%s3 + $0xd8] sm:$0xff]
  %v312 = vld [vmem:[%s3 + $0xe0] sm:$0xff]
  %v313 = vld [vmem:[%s3 + $0xe8] sm:$0xff]
  %v314 = vld [vmem:[%s3 + $0xf0] sm:$0xff]
  %v315 = vld [vmem:[%s3 + $0xf8] sm:$0xff]
  %v316 = vld [vmem:[%s4] sm:$0x3]
  %v318 = vlaneseq
  %v319 = vshrl.u32 %v318, 7
  %v320 = vsub.s32 0, %v319
  %v321 = vrot.slane %v316, %v320
  %v322 = vlaneseq
  %v323 = vshrl.u32 %v322, 7
  %v324 = vsub.s32 1, %v323
  %v325 = vrot.slane %v316, %v324
  %v360 = vunpack.c.l.b16 %v284
  %v361 = vunpack.c.h.b16 %v284
  %v362 = vunpack.c.l.b16 %v285
  %v363 = vunpack.c.h.b16 %v285
  %v364 = vunpack.c.l.b16 %v286
  %v365 = vunpack.c.h.b16 %v286
  %v366 = vunpack.c.l.b16 %v287
  %v367 = vunpack.c.h.b16 %v287
  %v368 = vunpack.c.l.b16 %v288
  %v369 = vunpack.c.h.b16 %v288
  %v370 = vunpack.c.l.b16 %v289
  %v371 = vunpack.c.h.b16 %v289
  %v372 = vunpack.c.l.b16 %v290
  %v373 = vunpack.c.h.b16 %v290
  %v374 = vunpack.c.l.b16 %v291
  %v375 = vunpack.c.h.b16 %v291
  %v376 = vunpack.c.l.b16 %v292
  %v377 = vunpack.c.h.b16 %v292
  %v378 = vunpack.c.l.b16 %v293
  %v379 = vunpack.c.h.b16 %v293
  %v380 = vunpack.c.l.b16 %v294
  %v381 = vunpack.c.h.b16 %v294
  %v382 = vunpack.c.l.b16 %v295
  %v383 = vunpack.c.h.b16 %v295
  %v384 = vunpack.c.l.b16 %v296
  %v385 = vunpack.c.h.b16 %v296
  %v386 = vunpack.c.l.b16 %v297
  %v387 = vunpack.c.h.b16 %v297
  %v388 = vunpack.c.l.b16 %v298
  %v389 = vunpack.c.h.b16 %v298
  %v390 = vunpack.c.l.b16 %v299
  %v391 = vunpack.c.h.b16 %v299
  %v392 = vunpack.c.l.b16 %v300
  %v393 = vunpack.c.h.b16 %v300
  %v394 = vunpack.c.l.b16 %v301
  %v395 = vunpack.c.h.b16 %v301
  %v396 = vunpack.c.l.b16 %v302
  %v397 = vunpack.c.h.b16 %v302
  %v398 = vunpack.c.l.b16 %v303
  %v399 = vunpack.c.h.b16 %v303
  %v400 = vunpack.c.l.b16 %v304
  %v401 = vunpack.c.h.b16 %v304
  %v402 = vunpack.c.l.b16 %v305
  %v403 = vunpack.c.h.b16 %v305
  %v404 = vunpack.c.l.b16 %v306
  %v405 = vunpack.c.h.b16 %v306
  %v406 = vunpack.c.l.b16 %v307
  %v407 = vunpack.c.h.b16 %v307
  %v408 = vunpack.c.l.b16 %v308
  %v409 = vunpack.c.h.b16 %v308
  %v410 = vunpack.c.l.b16 %v309
  %v411 = vunpack.c.h.b16 %v309
  %v412 = vunpack.c.l.b16 %v310
  %v413 = vunpack.c.h.b16 %v310
  %v414 = vunpack.c.l.b16 %v311
  %v415 = vunpack.c.h.b16 %v311
  %v416 = vunpack.c.l.b16 %v312
  %v417 = vunpack.c.h.b16 %v312
  %v418 = vunpack.c.l.b16 %v313
  %v419 = vunpack.c.h.b16 %v313
  %v420 = vunpack.c.l.b16 %v314
  %v421 = vunpack.c.h.b16 %v314
  %v422 = vunpack.c.l.b16 %v315
  %v423 = vunpack.c.h.b16 %v315
  %v424 = vpack.c.b16 %v362, %v360
  %v425 = vpack.c.b16 %v363, %v361
  %v426 = vpack.c.b16 %v366, %v364
  %v427 = vpack.c.b16 %v367, %v365
  %v428 = vpack.c.b16 %v370, %v368
  %v429 = vpack.c.b16 %v371, %v369
  %v430 = vpack.c.b16 %v374, %v372
  %v431 = vpack.c.b16 %v375, %v373
  %v432 = vpack.c.b16 %v378, %v376
  %v433 = vpack.c.b16 %v379, %v377
  %v434 = vpack.c.b16 %v382, %v380
  %v435 = vpack.c.b16 %v383, %v381
  %v436 = vpack.c.b16 %v386, %v384
  %v437 = vpack.c.b16 %v387, %v385
  %v438 = vpack.c.b16 %v390, %v388
  %v439 = vpack.c.b16 %v391, %v389
  %v440 = vpack.c.b16 %v394, %v392
  %v441 = vpack.c.b16 %v395, %v393
  %v442 = vpack.c.b16 %v398, %v396
  %v443 = vpack.c.b16 %v399, %v397
  %v444 = vpack.c.b16 %v402, %v400
  %v445 = vpack.c.b16 %v403, %v401
  %v446 = vpack.c.b16 %v406, %v404
  %v447 = vpack.c.b16 %v407, %v405
  %v448 = vpack.c.b16 %v410, %v408
  %v449 = vpack.c.b16 %v411, %v409
  %v450 = vpack.c.b16 %v414, %v412
  %v451 = vpack.c.b16 %v415, %v413
  %v452 = vpack.c.b16 %v418, %v416
  %v453 = vpack.c.b16 %v419, %v417
  %v454 = vpack.c.b16 %v422, %v420
  %v455 = vpack.c.b16 %v423, %v421
  %488 = vmatprep.subr.bf16.mxu0 %v425
  %489 = vmatpush1.bf16.msra.mxu0 %v424
  %490 = vmatprep.subr.bf16.mxu0 %v427
  %491 = vmatpush1.bf16.msra.mxu0 %v426
  %492 = vmatprep.subr.bf16.mxu0 %v429
  %493 = vmatpush1.bf16.msra.mxu0 %v428
  %494 = vmatprep.subr.bf16.mxu0 %v431
  %495 = vmatpush1.bf16.msra.mxu0 %v430
  %496 = vmatprep.subr.bf16.mxu0 %v433
  %497 = vmatpush1.bf16.msra.mxu0 %v432
  %498 = vmatprep.subr.bf16.mxu0 %v435
  %499 = vmatpush1.bf16.msra.mxu0 %v434
  %500 = vmatprep.subr.bf16.mxu0 %v437
  %501 = vmatpush1.bf16.msra.mxu0 %v436
  %502 = vmatprep.subr.bf16.mxu0 %v439
  %503 = vmatpush1.bf16.msra.mxu0 %v438
  %504 = vmatprep.subr.bf16.mxu0 %v441
  %505 = vmatpush1.bf16.msra.mxu0 %v440
  %506 = vmatprep.subr.bf16.mxu0 %v443
  %507 = vmatpush1.bf16.msra.mxu0 %v442
  %508 = vmatprep.subr.bf16.mxu0 %v445
  %509 = vmatpush1.bf16.msra.mxu0 %v444
  %510 = vmatprep.subr.bf16.mxu0 %v447
  %511 = vmatpush1.bf16.msra.mxu0 %v446
  %512 = vmatprep.subr.bf16.mxu0 %v449
  %513 = vmatpush1.bf16.msra.mxu0 %v448
  %514 = vmatprep.subr.bf16.mxu0 %v451
  %515 = vmatpush1.bf16.msra.mxu0 %v450
  %516 = vmatprep.subr.bf16.mxu0 %v453
  %517 = vmatpush1.bf16.msra.mxu0 %v452
  %518 = vmatprep.subr.bf16.mxu0 %v455
  %519 = vmatpush1.bf16.msra.mxu0 %v454
  %520 = vmatprep.mubr.bf16.mxu0 %v283
  %521 = vmatmul.mubr.bf16.gmra.mrb[0].mxu0 %v282
  %v522 = vpop.f32.mrb[0].mxu0
  %v523 = vadd.f32 %v321, %v522
  %v524 = vpop.f32.mrb[0].mxu0
  %v525 = vadd.f32 %v325, %v524
  %v526 = vpop.f32.mrb[0].mxu0
  %v527 = vpop.f32.mrb[0].mxu0
  %528 = vdwg.mxu0
  %v529 = vmax.f32 %v523, 0.0
  %v530 = vmax.f32 %v525, 0.0
  %v531 = vpack.c.bf16 %v529, %v529
  %v532 = vpack.c.bf16 %v530, %v530
  %v533 = vld [vmem:[%s5] sm:$0xf]
  %v534 = vld [vmem:[%s5 + $0x4] sm:$0xf]
  %v535 = vld [vmem:[%s5 + $0x8] sm:$0xf]
  %v536 = vld [vmem:[%s5 + $0xc] sm:$0xf]
  %v537 = vld [vmem:[%s5 + $0x10] sm:$0xf]
  %v538 = vld [vmem:[%s5 + $0x14] sm:$0xf]
  %v539 = vld [vmem:[%s5 + $0x18] sm:$0xf]
  %v540 = vld [vmem:[%s5 + $0x1c] sm:$0xf]
  %v541 = vld [vmem:[%s5 + $0x20] sm:$0xf]
  %v542 = vld [vmem:[%s5 + $0x24] sm:$0xf]
  %v543 = vld [vmem:[%s5 + $0x28] sm:$0xf]
  %v544 = vld [vmem:[%s5 + $0x2c] sm:$0xf]
  %v545 = vld [vmem:[%s5 + $0x30] sm:$0xf]
  %v546 = vld [vmem:[%s5 + $0x34] sm:$0xf]
  %v547 = vld [vmem:[%s5 + $0x38] sm:$0xf]
  %v548 = vld [vmem:[%s5 + $0x3c] sm:$0xf]
  %v549 = vld [vmem:[%s5 + $0x40] sm:$0xf]
  %v550 = vld [vmem:[%s5 + $0x44] sm:$0xf]
  %v551 = vld [vmem:[%s5 + $0x48] sm:$0xf]
  %v552 = vld [vmem:[%s5 + $0x4c] sm:$0xf]
  %v553 = vld [vmem:[%s5 + $0x50] sm:$0xf]
  %v554 = vld [vmem:[%s5 + $0x54] sm:$0xf]
  %v555 = vld [vmem:[%s5 + $0x58] sm:$0xf]
  %v556 = vld [vmem:[%s5 + $0x5c] sm:$0xf]
  %v557 = vld [vmem:[%s5 + $0x60] sm:$0xf]
  %v558 = vld [vmem:[%s5 + $0x64] sm:$0xf]
  %v559 = vld [vmem:[%s5 + $0x68] sm:$0xf]
  %v560 = vld [vmem:[%s5 + $0x6c] sm:$0xf]
  %v561 = vld [vmem:[%s5 + $0x70] sm:$0xf]
  %v562 = vld [vmem:[%s5 + $0x74] sm:$0xf]
  %v563 = vld [vmem:[%s5 + $0x78] sm:$0xf]
  %v564 = vld [vmem:[%s5 + $0x7c] sm:$0xf]
  %v565 = vld [vmem:[%s6] sm:$0x1]
  %v567 = vlaneseq
  %v568 = vshrl.u32 %v567, 7
  %v569 = vsub.s32 0, %v568
  %v570 = vrot.slane %v565, %v569
  %v604 = vunpack.c.l.b16 %v533
  %v605 = vunpack.c.l.b16 %v534
  %v606 = vunpack.c.l.b16 %v535
  %v607 = vunpack.c.l.b16 %v536
  %v608 = vunpack.c.l.b16 %v537
  %v609 = vunpack.c.l.b16 %v538
  %v610 = vunpack.c.l.b16 %v539
  %v611 = vunpack.c.l.b16 %v540
  %v612 = vunpack.c.l.b16 %v541
  %v613 = vunpack.c.l.b16 %v542
  %v614 = vunpack.c.l.b16 %v543
  %v615 = vunpack.c.l.b16 %v544
  %v616 = vunpack.c.l.b16 %v545
  %v617 = vunpack.c.l.b16 %v546
  %v618 = vunpack.c.l.b16 %v547
  %v619 = vunpack.c.l.b16 %v548
  %v620 = vunpack.c.l.b16 %v549
  %v621 = vunpack.c.l.b16 %v550
  %v622 = vunpack.c.l.b16 %v551
  %v623 = vunpack.c.l.b16 %v552
  %v624 = vunpack.c.l.b16 %v553
  %v625 = vunpack.c.l.b16 %v554
  %v626 = vunpack.c.l.b16 %v555
  %v627 = vunpack.c.l.b16 %v556
  %v628 = vunpack.c.l.b16 %v557
  %v629 = vunpack.c.l.b16 %v558
  %v630 = vunpack.c.l.b16 %v559
  %v631 = vunpack.c.l.b16 %v560
  %v632 = vunpack.c.l.b16 %v561
  %v633 = vunpack.c.l.b16 %v562
  %v634 = vunpack.c.l.b16 %v563
  %v635 = vunpack.c.l.b16 %v564
  %v636 = vpack.c.b16 %v605, %v604
  %v637 = vpack.c.b16 %v607, %v606
  %v638 = vpack.c.b16 %v609, %v608
  %v639 = vpack.c.b16 %v611, %v610
  %v640 = vpack.c.b16 %v613, %v612
  %v641 = vpack.c.b16 %v615, %v614
  %v642 = vpack.c.b16 %v617, %v616
  %v643 = vpack.c.b16 %v619, %v618
  %v644 = vpack.c.b16 %v621, %v620
  %v645 = vpack.c.b16 %v623, %v622
  %v646 = vpack.c.b16 %v625, %v624
  %v647 = vpack.c.b16 %v627, %v626
  %v648 = vpack.c.b16 %v629, %v628
  %v649 = vpack.c.b16 %v631, %v630
  %v650 = vpack.c.b16 %v633, %v632
  %v651 = vpack.c.b16 %v635, %v634
  %668 = vmatprep.subr.bf16.mxu0 0
  %669 = vmatpush1.bf16.msra.mxu0 %v636
  %670 = vmatprep.subr.bf16.mxu0 0
  %671 = vmatpush1.bf16.msra.mxu0 %v637
  %672 = vmatprep.subr.bf16.mxu0 0
  %673 = vmatpush1.bf16.msra.mxu0 %v638
  %674 = vmatprep.subr.bf16.mxu0 0
  %675 = vmatpush1.bf16.msra.mxu0 %v639
  %676 = vmatprep.subr.bf16.mxu0 0
  %677 = vmatpush1.bf16.msra.mxu0 %v640
  %678 = vmatprep.subr.bf16.mxu0 0
  %679 = vmatpush1.bf16.msra.mxu0 %v641
  %680 = vmatprep.subr.bf16.mxu0 0
  %681 = vmatpush1.bf16.msra.mxu0 %v642
  %682 = vmatprep.subr.bf16.mxu0 0
  %683 = vmatpush1.bf16.msra.mxu0 %v643
  %684 = vmatprep.subr.bf16.mxu0 0
  %685 = vmatpush1.bf16.msra.mxu0 %v644
  %686 = vmatprep.subr.bf16.mxu0 0
  %687 = vmatpush1.bf16.msra.mxu0 %v645
  %688 = vmatprep.subr.bf16.mxu0 0
  %689 = vmatpush1.bf16.msra.mxu0 %v646
  %690 = vmatprep.subr.bf16.mxu0 0
  %691 = vmatpush1.bf16.msra.mxu0 %v647
  %692 = vmatprep.subr.bf16.mxu0 0
  %693 = vmatpush1.bf16.msra.mxu0 %v648
  %694 = vmatprep.subr.bf16.mxu0 0
  %695 = vmatpush1.bf16.msra.mxu0 %v649
  %696 = vmatprep.subr.bf16.mxu0 0
  %697 = vmatpush1.bf16.msra.mxu0 %v650
  %698 = vmatprep.subr.bf16.mxu0 0
  %699 = vmatpush1.bf16.msra.mxu0 %v651
  %700 = vmatprep.mubr.bf16.mxu0 %v532
  %701 = vmatmul.mubr.bf16.gmra.mrb[0].mxu0 %v531
  %v702 = vpop.f32.mrb[0].mxu0
  %v703 = vadd.f32 %v570, %v702
  %v704 = vpop.f32.mrb[0].mxu0
  %v705 = vpop.f32.mrb[0].mxu0
  %v706 = vpop.f32.mrb[0].mxu0
  %707 = vdwg.mxu0
  %v708 = vmul.f32 %v703, 0.5
  %v709 = vtanh.pop %v708
  %v710 = vadd.f32 %v709, 1.0
  %v711 = vmul.f32 %v710, 0.5
  %712 = vst [vmem:[%s7] sm:$0xff] %v711
  // Predicated region
  $region30: #{neural_network_forward.1} parent=0 // pred_check
    _
  $region31: #{neural_network_forward.1} parent=0 // pred_check_branch
    %714 = sbr.rel (0) target = $region33
  $region32: #{neural_network_forward.1} parent=0 // pred_region
    _
  $region33: #{neural_network_forward.1} parent=0 // pred_fallthru
    _
  // Predicated region
  $region34: #{neural_network_forward.1} parent=0 // pred_check
    _
  $region35: #{neural_network_forward.1} parent=0 // pred_check_branch
    %716 = sbr.rel (0) target = $region37
  $region36: #{neural_network_forward.1} parent=0 // pred_region
    _
  $region37: #{neural_network_forward.1} parent=0 // pred_fallthru
    _

</llo_original>
